<compile_context>
chip_gen: v6e
topology: v6e:2x2x1
jax: 0.10.0
libtpu: 0.0.40
codegen_flags: <defaults>
</compile_context>

<pallas_src>
import math
from functools import lru_cache

import numpy as np
import jax
import jax.numpy as jnp
from jax.experimental import pallas as pl
from jax.experimental.pallas import tpu as pltpu


def _sinusoidal_kernel(x_ref, fp_ref, out_ref):
    # x_ref:   (TB, 1)   f32 timestep column tile
    # fp_ref:  (2, dim)  f32 resident rows: row 0 = [freqs | freqs], row 1 = [0 | pi/2]
    # out_ref: (TB, dim) output tile = sin(x * freqs_full + phase)  (== [sin | cos])
    arg = x_ref[...] * fp_ref[0:1, :] + fp_ref[1:2, :]
    out_ref[...] = jnp.sin(arg).astype(out_ref.dtype)


@lru_cache(maxsize=None)
def _freqs_phase_np(dim: int) -> np.ndarray:
    """Compile-time constant (2, dim): [freqs|freqs] and [0|pi/2] phase row."""
    half_dim = dim // 2
    scale = math.log(10000.0) / (half_dim - 1)
    freqs = np.exp(np.arange(half_dim, dtype=np.float32) * np.float32(-scale))
    freqs = freqs.astype(np.float32)
    freqs_full = np.concatenate([freqs, freqs])
    phase = np.concatenate([np.zeros(half_dim, np.float32),
                            np.full(half_dim, np.pi / 2.0, np.float32)])
    return np.stack([freqs_full, phase]).astype(np.float32)  # (2, dim)


def sinusoidal_pos_emb(x: jax.Array, dim: int, *,
                       out_dtype=jnp.float32,
                       target_tile_bytes: int = 2 << 20,
                       min_grid_steps: int = 4) -> jax.Array:
    """x: (B,) -> (B, dim).  Matches PyTorch SinusoidalPosEmb.forward."""
    assert x.ndim == 1
    assert dim % 2 == 0, "dim must be even"
    half_dim = dim // 2
    assert half_dim >= 2, "dim must be >= 4 (log(1e4)/(half_dim-1) division)"
    b = x.shape[0]

    itemsize = jnp.dtype(out_dtype).itemsize
    # Sublane packing granularity of the OUTPUT dtype: 8 rows/vreg for 4-byte,
    # 16 for 2-byte (bf16), 32 for 1-byte types.
    sub = max(8, 32 // itemsize)

    # Row tile: ~target_tile_bytes of output per grid step, rounded to the
    # sublane granule.  Cap it so the grid keeps >= min_grid_steps steps when B
    # allows it (v7x megacore sharding of the "parallel" axis), and never make
    # it larger than the sublane-rounded batch.
    bytes_per_row = dim * itemsize
    tb = max(sub, (target_tile_bytes // max(1, bytes_per_row)) // sub * sub)
    cap = max(sub, pl.cdiv(pl.cdiv(b, min_grid_steps), sub) * sub)
    tb = min(tb, cap)
    tb = min(tb, pl.cdiv(b, sub) * sub)

    grid = (pl.cdiv(b, tb),)

    x2d = x.reshape(b, 1).astype(jnp.float32)
    freqs_phase = jnp.asarray(_freqs_phase_np(dim))  # (2, dim) compile-time const

    out = pl.pallas_call(
        _sinusoidal_kernel,
        out_shape=jax.ShapeDtypeStruct((b, dim), out_dtype),
        grid_spec=pl.GridSpec(
            grid=grid,
            in_specs=[
                # (tb, 1) x column tile; lane-padded to 128 in VMEM (~tb*512 B/buf),
                # accounted for in the VMEM budget comment above.
                pl.BlockSpec((tb, 1), lambda i: (i, 0)),
                # Resident constant rows, same block every step.
                pl.BlockSpec((2, dim), lambda i: (0, 0)),
            ],
            out_specs=pl.BlockSpec((tb, dim), lambda i: (i, 0)),
        ),
        compiler_params=pltpu.CompilerParams(
            dimension_semantics=("parallel",),
        ),
    )(x2d, freqs_phase)

    return out


def sinusoidal_pos_emb_ref(x: jax.Array, dim: int) -> jax.Array:
    """Pure-JAX reference mirroring the PyTorch forward."""
    half_dim = dim // 2
    emb = math.log(10000.0) / (half_dim - 1)
    emb = jnp.exp(jnp.arange(half_dim, dtype=jnp.float32) * -emb)
    emb = x[:, None].astype(jnp.float32) * emb[None, :]
    return jnp.concatenate([jnp.sin(emb), jnp.cos(emb)], axis=-1)


if __name__ == "__main__":
    DIM = 256  # half_dim = 128 -> output slab lane-dense at 256 lanes

    # Case 1: small batch, single full tile, f32 output.
    B1 = 8
    x1 = jax.random.uniform(jax.random.PRNGKey(0), (B1,), dtype=jnp.float32,
                            minval=0.0, maxval=1000.0)
    out1 = jax.block_until_ready(sinusoidal_pos_emb(x1, DIM))
    ref1 = sinusoidal_pos_emb_ref(x1, DIM)
    assert out1.shape == (B1, DIM)
    assert jnp.allclose(out1, ref1, atol=2e-3, rtol=1e-3), "mismatch vs reference (B=8)"

    # Case 2: non-multiple-of-tile batch -> exercises the masked trailing
    # partial block (no padding, no post-slice copy), f32 output.
    B2 = 20
    x2 = jax.random.uniform(jax.random.PRNGKey(1), (B2,), dtype=jnp.float32,
                            minval=0.0, maxval=1000.0)
    out2 = jax.block_until_ready(sinusoidal_pos_emb(x2, DIM))
    ref2 = sinusoidal_pos_emb_ref(x2, DIM)
    assert out2.shape == (B2, DIM)
    assert jnp.allclose(out2, ref2, atol=2e-3, rtol=1e-3), "mismatch vs reference (B=20)"

    # Case 3: bf16 output path (16-row sublane packing, halved writeback).
    out3 = jax.block_until_ready(
        sinusoidal_pos_emb(x2, DIM, out_dtype=jnp.bfloat16))
    assert out3.shape == (B2, DIM) and out3.dtype == jnp.bfloat16
    assert jnp.allclose(out3.astype(jnp.float32), ref2, atol=2e-2, rtol=2e-2), \
        "mismatch vs reference (bf16)"

    print("KERNEL_OK")
</pallas_src>

<mosaic_0001>
module attributes {stable_mosaic.version = 11 : i64} {
  func.func @_sinusoidal_kernel(%arg0: i32, %arg1: memref<8x1xf32, #tpu.memory_space<vmem>>, %arg2: memref<2x256xf32, #tpu.memory_space<vmem>>, %arg3: memref<8x256xf32, #tpu.memory_space<vmem>>) attributes {dimension_semantics = [#tpu.dimension_semantics<parallel>], iteration_bounds = array<i64: 1>, scalar_prefetch = 0 : i64, scratch_operands = 0 : i64, tpu.core_type = #tpu.core_type<tc>, window_params = [{transform_indices = @transform_0, window_bounds = array<i64: 8, 1>}, {pipeline_mode = #tpu.pipeline_mode<synchronous>, transform_indices = @transform_1, window_bounds = array<i64: 2, 256>}, {transform_indices = @transform_2, window_bounds = array<i64: 8, 256>}]} {
    %c0 = arith.constant 0 : index
    %c0_0 = arith.constant 0 : index
    %0 = vector.load %arg1[%c0, %c0_0] : memref<8x1xf32, #tpu.memory_space<vmem>>, vector<8x1xf32>
    %c0_1 = arith.constant 0 : index
    %c0_2 = arith.constant 0 : index
    %1 = vector.load %arg2[%c0_1, %c0_2] : memref<2x256xf32, #tpu.memory_space<vmem>>, vector<1x256xf32>
    %2 = vector.broadcast %0 : vector<8x1xf32> to vector<8x256xf32>
    %3 = vector.broadcast %1 : vector<1x256xf32> to vector<8x256xf32>
    %4 = arith.mulf %2, %3 : vector<8x256xf32>
    %c1 = arith.constant 1 : index
    %c0_3 = arith.constant 0 : index
    %5 = vector.load %arg2[%c1, %c0_3] : memref<2x256xf32, #tpu.memory_space<vmem>>, vector<1x256xf32>
    %6 = vector.broadcast %5 : vector<1x256xf32> to vector<8x256xf32>
    %7 = arith.addf %4, %6 : vector<8x256xf32>
    %8 = math.sin %7 : vector<8x256xf32>
    %c0_4 = arith.constant 0 : index
    %c0_5 = arith.constant 0 : index
    %9 = vector.load %arg3[%c0_4, %c0_5] : memref<8x256xf32, #tpu.memory_space<vmem>>, vector<8x256xf32>
    tpu.vector_store %arg3[%c0_4, %c0_5], %8 {strides = array<i32>} : memref<8x256xf32, #tpu.memory_space<vmem>>, vector<8x256xf32>,
    return
  }
  func.func @transform_0(%arg0: i32) -> (i32, i32) {
    %c0_i32 = arith.constant 0 : i32
    %c0_i32_0 = arith.constant 0 : i32
    return %arg0, %c0_i32 : i32, i32
  }
  func.func @transform_1(%arg0: i32) -> (i32, i32) {
    %c0_i32 = arith.constant 0 : i32
    %c0_i32_0 = arith.constant 0 : i32
    %c0_i32_1 = arith.constant 0 : i32
    return %c0_i32, %c0_i32_0 : i32, i32
  }
  func.func @transform_2(%arg0: i32) -> (i32, i32) {
    %c0_i32 = arith.constant 0 : i32
    %c0_i32_0 = arith.constant 0 : i32
    return %arg0, %c0_i32 : i32, i32
  }
}

</mosaic_0001>

<llo_original>
// kernel: tpu_custom_call.1
$region0: #{tpu_custom_call.1}
  #allocation0 [shape = 'u32[]', space=smem, size = 0x4, offset = 0x4, fixed_abs, tag = 'smem constant byte address 0x4 - core index']
  #allocation1 [shape = 'u32[144,128]{1,0:T(1,128)}', space=vmem, size = 0x12000, scoped, tag = 'internal scratch']
  %s0 = inlined_call_operand.vmem [shape: f32[8,1], index: 0, kind: input, shape index: {}]
  %s1 = inlined_call_operand.vmem [shape: f32[2,256], index: 1, kind: input, shape index: {}]
  %s2 = inlined_call_operand.hbm [shape: f32[8,256], index: 2, kind: output, shape index: {}]
  %s3 = sld [smem:[#allocation0]]
  $region18: #{tpu_custom_call.1} parent=0
    _
  %s5 = ssub.s32 1, %s3
  %s6 = scalar_select 0, %s5, %s3
  $region1: #{tpu_custom_call.1} parent=0
    #allocation2 [shape = 'u8[8192]{0}', space=vmem, size = 0x2000, scoped, tag = 'output window, operand 0, single buffered']
    #allocation3 [shape = 's32[1]{0}', space=sflag, size = 0x4, scoped, tag = 'scoped memory for tpu_custom_call.1']
    %7 = vsyncpa [#allocation3], 0
    // Predicated region
    $region2: #{tpu_custom_call.1} parent=1 // pred_check
      _
    $region3: #{tpu_custom_call.1} parent=1 // pred_check_branch
      %9 = sbr.rel (0) target = $region5
    $region4: #{tpu_custom_call.1} parent=1 // pred_region
      _
    $region5: #{tpu_custom_call.1} parent=1 // pred_fallthru
      _
    // Predicated region
    $region6: #{tpu_custom_call.1} parent=1 // pred_check
      _
    $region7: #{tpu_custom_call.1} parent=1 // pred_check_branch
      %11 = sbr.rel (0) target = $region9
    $region8: #{tpu_custom_call.1} parent=1 // pred_region
      _
    $region9: #{tpu_custom_call.1} parent=1 // pred_fallthru
      _
    %v12 = vld [vmem:[%s0] sm:$0xff]
    %v13 = vld [vmem:[%s1] ss:$2 sm:$0x3]
    %15 = vset.pattern.permute.xlu0 0
    %16 = vperm.xlu0 %15, %v12
    %v17 = vpop.permute.xlu0 %16
    %v20 = vlaneseq
    %v21 = vshrl.u32 %v20, 7
    %v22 = vsub.s32 0, %v21
    %v23 = vrot.slane %v13, %v22
    %v24 = vlaneseq
    %v25 = vshrl.u32 %v24, 7
    %v26 = vsub.s32 1, %v25
    %v27 = vrot.slane %v13, %v26
    %v30 = vmul.f32 %v17, %v23
    %v31 = vmul.f32 %v17, %v27
    %s32 = scalar_lea.vmem %s1, 1
    %v33 = vld [vmem:[%s32] ss:$2 sm:$0x3]
    %v35 = vlaneseq
    %v36 = vshrl.u32 %v35, 7
    %v37 = vsub.s32 0, %v36
    %v38 = vrot.slane %v33, %v37
    %v39 = vlaneseq
    %v40 = vshrl.u32 %v39, 7
    %v41 = vsub.s32 1, %v40
    %v42 = vrot.slane %v33, %v41
    %v45 = vadd.f32 %v30, %v38
    %v46 = vadd.f32 %v31, %v42
    %v47 = vand.u32 2147483647, %v45
    %vm48 = vcmp.le.f32.partialorder %v47, 0.7853982
    %vm49 = vcmp.lt.s32.totalorder %v45, 0
    %v50 = vand.u32 %v45, 2139095040
    %v51 = vshrl.u32 %v50, 23
    %v52 = vsub.s32 %v51, 127
    %v53 = vand.u32 2147483647, %v45
    %v54 = vand.u32 %v53, 8388607
    %v55 = vor.u32 %v54, 8388608
    %v56 = vsub.s32 0, %v55
    %v57 = vadd.s32 %v52, 1
    %vm58 = vcmp.gt.s32.totalorder %v57, 0
    %v59 = vsel %vm58, %v57, 0
    %v60 = vshrl.u32 %v59, 5
    %v61 = vand.u32 %v59, 31
    %v62 = vsub.s32 32, %v61
    %v63 = vshrl.u32 683565275, %v62
    %v64 = vshll.u32 683565275, %v61
    %v65 = vshrl.u32 2475754826, %v62
    %v66 = vor.u32 %v64, %v65
    %v67 = vshll.u32 2475754826, %v61
    %v68 = vshrl.u32 2131351028, %v62
    %v69 = vor.u32 %v67, %v68
    %v70 = vshll.u32 2131351028, %v61
    %v71 = vshrl.u32 2102212464, %v62
    %v72 = vor.u32 %v70, %v71
    %v73 = vshll.u32 2102212464, %v61
    %v74 = vshrl.u32 920167782, %v62
    %v75 = vor.u32 %v73, %v74
    %v76 = vshll.u32 920167782, %v61
    %v77 = vshrl.u32 1326507024, %v62
    %v78 = vor.u32 %v76, %v77
    %vm79 = vcmp.lt.s32.totalorder %v60, 1
    %vm80 = vcmp.lt.s32.totalorder %v60, 2
    %vm81 = vcmp.lt.s32.totalorder %v60, 3
    %vm82 = vcmp.lt.s32.totalorder %v60, 4
    %v83 = vsel %vm79, %v63, %v66
    %v84 = vsel %vm82, %v72, 2102212464
    %v85 = vsel %vm81, %v69, %v84
    %v86 = vsel %vm80, %v83, %v85
    %v87 = vsel %vm79, %v66, %v69
    %v88 = vsel %vm82, %v75, 920167782
    %v89 = vsel %vm81, %v72, %v88
    %v90 = vsel %vm80, %v87, %v89
    %v91 = vsel %vm79, %v69, %v72
    %v92 = vsel %vm82, %v78, 1326507024
    %v93 = vsel %vm81, %v75, %v92
    %v94 = vsel %vm80, %v91, %v93
    %v95 = vshll.u32 %v55, 8
    %v96 = vmul.u32.u64.compose %v95, %v94
    %v97 = vextract.low.u32 %v96
    %v98 = vextract.high.u32 %v96
    %v99 = vmul.u32.u64.compose %v95, %v90
    %v100 = vextract.low.u32 %v99
    %v101 = vextract.high.u32 %v99
    %v102 = vmul.u32 %v95, %v86
    %v103 = vadd.s32 %v98, %v100
    %vm104 = vc.u32 %v98, %v100
    %v105 = vadd.s32 %v101, 1
    %v106 = vsel %vm104, %v105, %v101
    %v107 = vadd.s32 %v102, %v106
    %v108 = vadd.s32 %v107, 536870912
    %v109 = vshrl.u32 %v108, 30
    %v110 = vshll.u32 %v109, 30
    %v111 = vsub.s32 %v107, %v110
    %vm112 = vcmp.lt.s32.totalorder %v111, 0
    %v113 = vsub.s32 0, %v111
    %v114 = vsel %vm112, %v113, %v111
    %v115 = vclz %v114
    %v116 = vsub.s32 %v115, 2
    %vm117 = vcmp.gt.s32.totalorder 0, %v116
    %v118 = vsel %vm117, 0, %v116
    %v119 = vsub.s32 32, %v118
    %v120 = vshll.u32 %v111, %v118
    %v121 = vshrl.u32 %v103, %v119
    %v122 = vor.u32 %v120, %v121
    %v123 = vsub.s32 4294967266, %v118
    %v124 = vadd.s32 %v123, 127
    %v125 = vshll.u32 %v124, 23
    %v126 = vor.u32 4788187, %v125
    %v127 = vand.u32 2147483647, %v126
    %v129 = vcvt.s32.f32 %v122
    %v130 = vmul.f32 %v129, %v127
    %v131 = vxor.u32 %v130, 2147483648
    %v132 = vsel %vm49, %v131, %v130
    %v133 = vsub.s32 4, %v109
    %v134 = vsel %vm49, %v133, %v109
    %v135 = vsel %vm48, %v45, %v132
    %v136 = vsel %vm48, 0, %v134
    %v137 = vcosq.f32.pop %v135
    %v138 = vsinq.f32.pop %v135
    %vm139 = vweird.f32 %v45
    %v140 = vadd.s32 %v136, 3
    %v141 = vand.u32 %v140, 3
    %vm142 = vcmp.lt.s32.totalorder %v141, 2
    %vm143 = vcmp.eq.s32.totalorder %v141, 0
    %v144 = vxor.u32 %v138, 2147483648
    %v145 = vsel %vm143, %v137, %v144
    %vm146 = vcmp.eq.s32.totalorder %v141, 2
    %v147 = vxor.u32 %v137, 2147483648
    %v148 = vsel %vm146, %v147, %v138
    %v149 = vsel %vm142, %v145, %v148
    %v150 = vsel %vm139, nan, %v149
    %v151 = vand.u32 2147483647, %v46
    %vm152 = vcmp.le.f32.partialorder %v151, 0.7853982
    %vm153 = vcmp.lt.s32.totalorder %v46, 0
    %v154 = vand.u32 %v46, 2139095040
    %v155 = vshrl.u32 %v154, 23
    %v156 = vsub.s32 %v155, 127
    %v157 = vand.u32 2147483647, %v46
    %v158 = vand.u32 %v157, 8388607
    %v159 = vor.u32 %v158, 8388608
    %v160 = vsub.s32 0, %v159
    %v161 = vadd.s32 %v156, 1
    %vm162 = vcmp.gt.s32.totalorder %v161, 0
    %v163 = vsel %vm162, %v161, 0
    %v164 = vshrl.u32 %v163, 5
    %v165 = vand.u32 %v163, 31
    %v166 = vsub.s32 32, %v165
    %v167 = vshrl.u32 683565275, %v166
    %v168 = vshll.u32 683565275, %v165
    %v169 = vshrl.u32 2475754826, %v166
    %v170 = vor.u32 %v168, %v169
    %v171 = vshll.u32 2475754826, %v165
    %v172 = vshrl.u32 2131351028, %v166
    %v173 = vor.u32 %v171, %v172
    %v174 = vshll.u32 2131351028, %v165
    %v175 = vshrl.u32 2102212464, %v166
    %v176 = vor.u32 %v174, %v175
    %v177 = vshll.u32 2102212464, %v165
    %v178 = vshrl.u32 920167782, %v166
    %v179 = vor.u32 %v177, %v178
    %v180 = vshll.u32 920167782, %v165
    %v181 = vshrl.u32 1326507024, %v166
    %v182 = vor.u32 %v180, %v181
    %vm183 = vcmp.lt.s32.totalorder %v164, 1
    %vm184 = vcmp.lt.s32.totalorder %v164, 2
    %vm185 = vcmp.lt.s32.totalorder %v164, 3
    %vm186 = vcmp.lt.s32.totalorder %v164, 4
    %v187 = vsel %vm183, %v167, %v170
    %v188 = vsel %vm186, %v176, 2102212464
    %v189 = vsel %vm185, %v173, %v188
    %v190 = vsel %vm184, %v187, %v189
    %v191 = vsel %vm183, %v170, %v173
    %v192 = vsel %vm186, %v179, 920167782
    %v193 = vsel %vm185, %v176, %v192
    %v194 = vsel %vm184, %v191, %v193
    %v195 = vsel %vm183, %v173, %v176
    %v196 = vsel %vm186, %v182, 1326507024
    %v197 = vsel %vm185, %v179, %v196
    %v198 = vsel %vm184, %v195, %v197
    %v199 = vshll.u32 %v159, 8
    %v200 = vmul.u32.u64.compose %v199, %v198
    %v201 = vextract.low.u32 %v200
    %v202 = vextract.high.u32 %v200
    %v203 = vmul.u32.u64.compose %v199, %v194
    %v204 = vextract.low.u32 %v203
    %v205 = vextract.high.u32 %v203
    %v206 = vmul.u32 %v199, %v190
    %v207 = vadd.s32 %v202, %v204
    %vm208 = vc.u32 %v202, %v204
    %v209 = vadd.s32 %v205, 1
    %v210 = vsel %vm208, %v209, %v205
    %v211 = vadd.s32 %v206, %v210
    %v212 = vadd.s32 %v211, 536870912
    %v213 = vshrl.u32 %v212, 30
    %v214 = vshll.u32 %v213, 30
    %v215 = vsub.s32 %v211, %v214
    %vm216 = vcmp.lt.s32.totalorder %v215, 0
    %v217 = vsub.s32 0, %v215
    %v218 = vsel %vm216, %v217, %v215
    %v219 = vclz %v218
    %v220 = vsub.s32 %v219, 2
    %vm221 = vcmp.gt.s32.totalorder 0, %v220
    %v222 = vsel %vm221, 0, %v220
    %v223 = vsub.s32 32, %v222
    %v224 = vshll.u32 %v215, %v222
    %v225 = vshrl.u32 %v207, %v223
    %v226 = vor.u32 %v224, %v225
    %v227 = vsub.s32 4294967266, %v222
    %v228 = vadd.s32 %v227, 127
    %v229 = vshll.u32 %v228, 23
    %v230 = vor.u32 4788187, %v229
    %v231 = vand.u32 2147483647, %v230
    %v233 = vcvt.s32.f32 %v226
    %v234 = vmul.f32 %v233, %v231
    %v235 = vxor.u32 %v234, 2147483648
    %v236 = vsel %vm153, %v235, %v234
    %v237 = vsub.s32 4, %v213
    %v238 = vsel %vm153, %v237, %v213
    %v239 = vsel %vm152, %v46, %v236
    %v240 = vsel %vm152, 0, %v238
    %v241 = vcosq.f32.pop %v239
    %v242 = vsinq.f32.pop %v239
    %vm243 = vweird.f32 %v46
    %v244 = vadd.s32 %v240, 3
    %v245 = vand.u32 %v244, 3
    %vm246 = vcmp.lt.s32.totalorder %v245, 2
    %vm247 = vcmp.eq.s32.totalorder %v245, 0
    %v248 = vxor.u32 %v242, 2147483648
    %v249 = vsel %vm247, %v241, %v248
    %vm250 = vcmp.eq.s32.totalorder %v245, 2
    %v251 = vxor.u32 %v241, 2147483648
    %v252 = vsel %vm250, %v251, %v242
    %v253 = vsel %vm246, %v249, %v252
    %v254 = vsel %vm243, nan, %v253
    %255 = vst [vmem:[#allocation2] sm:$0xff] %v150
    %256 = vst [vmem:[#allocation2 + $0x8] sm:$0xff] %v254
    // Predicated region
    $region10: #{tpu_custom_call.1} parent=1 // pred_check
      _
    $region11: #{tpu_custom_call.1} parent=1 // pred_check_branch
      %258 = sbr.rel (0) target = $region13
    $region12: #{tpu_custom_call.1} parent=1 // pred_region
      %s260 = ssub.s32 256, 256
      %261 = vsyncadd [#allocation3], %s260
      %s263 = sshll.u32 [#allocation2], 4
      %s264 = int_to_ptr.vmem [resolvable:$true] %s263
      %266 = dma.vmem_to_hbm [thread:$0]  %s264, 256, %s2, [#allocation3]
    $region13: #{tpu_custom_call.1} parent=1 // pred_fallthru
      _
    // Predicated region
    $region14: #{tpu_custom_call.1} parent=1 // pred_check
      _
    $region15: #{tpu_custom_call.1} parent=1 // pred_check_branch
      %268 = sbr.rel (0) target = $region17
    $region16: #{tpu_custom_call.1} parent=1 // pred_region
      %269 = dma.done [#allocation3], 256
    $region17: #{tpu_custom_call.1} parent=1 // pred_fallthru
      _
    %270 = vsyncpa [#allocation3], 1

</llo_original>
